<compile_context>
chip_gen: v5e
topology: v5e:2x2
jax: 0.10.0
libtpu: 0.0.40
codegen_flags: <defaults>
</compile_context>

<pallas_src>
import functools

import jax
import jax.numpy as jnp
from jax.experimental import pallas as pl
from jax.experimental.pallas import tpu as pltpu


def _full_spike_kernel(x_ref, rg_ref, tg_ref, u0_ref, b0_ref, z_ref,
                       u_sc, b_sc, q_sc, lz_sc,
                       *, reset_alpha, thr_alpha, refractory_period, tt):
    # grid = (batch_blocks, time_blocks); time is innermost, so reset the
    # carried state at the first time block of every batch block.
    @pl.when(pl.program_id(1) == 0)
    def _():
        u_sc[...] = jnp.broadcast_to(u0_ref[...], u_sc.shape)
        b_sc[...] = jnp.broadcast_to(b0_ref[...], b_sc.shape)
        q_sc[...] = jnp.zeros_like(q_sc)
        lz_sc[...] = jnp.zeros_like(lz_sc)

    # Hoisted scalar constants (f32, computed once).
    al = jnp.float32(reset_alpha)
    one_m_al = jnp.float32(1.0 - reset_alpha)
    bet = jnp.float32(thr_alpha)
    one_m_bet = jnp.float32(1.0 - thr_alpha)
    rp = jnp.float32(refractory_period)

    # Hoist the (1, N) -> (B_tile, N) parameter broadcasts out of the time loop.
    shp = u_sc.shape
    rg = jnp.broadcast_to(rg_ref[...], shp)
    tg = jnp.broadcast_to(tg_ref[...], shp)

    # Load carried state once; keep it in vregs across the fused time steps.
    u = u_sc[...]
    b = b_sc[...]
    q = q_sc[...]          # float32 refractory counter (small non-neg ints)
    last_z = lz_sc[...]

    # Fully-unrolled (static Python) recurrence over the TT steps in this
    # block; per-step x loads / z stores stay inside the loop to bound
    # register pressure.
    for i in range(tt):
        xt = x_ref[:, i, :]                               # (B_tile, N_pad)
        u = al * u + one_m_al * xt - last_z * rg
        z = jnp.logical_and((u - b) > 0.0, q <= 0.0).astype(jnp.float32)
        q = jnp.maximum(q - 1.0, 0.0) + rp * z
        b = bet * b + one_m_bet * z * tg
        last_z = z
        z_ref[:, i, :] = z.astype(z_ref.dtype)

    # Write carried state back for the next time block.
    u_sc[...] = u
    b_sc[...] = b
    q_sc[...] = q
    lz_sc[...] = last_z


def _pick_time_tile(T, cap=32):
    """Largest TT <= cap with T % TT == 0 and TT multiple of 8; else full T."""
    if T <= cap:
        return T
    for tt in range(cap, 0, -1):
        if T % tt == 0 and tt % 8 == 0:
            return tt
    return T


def _pick_batch_tile(B, TT, Np, budget_bytes):
    """Largest divisor of B whose resident VMEM estimate fits the budget."""
    def bytes_needed(bt):
        state = 4 * bt * Np * 4                 # u, b, q, last_z scratch
        blocks = 2 * 2 * bt * TT * Np * 4       # x + z blocks, double-buffered
        params = 2 * 4 * Np * 4                 # rg, tg, u0, b0 (double-buffered)
        return state + blocks + params
    for bt in range(B, 0, -1):
        if B % bt == 0 and bytes_needed(bt) <= budget_bytes:
            return bt
    return 1


def full_spike_forward(x, reset_gamma, thr_gamma, u0=None, b0=None,
                       reset_alpha=0.9, thr_alpha=0.95, refractory_period=5,
                       time_block=32, vmem_budget_bytes=12 * 1024 * 1024):
    """x: (B, T, N) float32 -> z: (B, T, N) float32 (PyTorch layout, no transposes)."""
    B, T, N = x.shape
    x = x.astype(jnp.float32)

    # Lane-dense padding of the neuron axis (multiple of 128). Pad columns get
    # zero input / zero gammas / zero init state, so they never spike.
    n_pad = (-N) % 128
    Np = N + n_pad

    def pad_row(p):
        p = jnp.asarray(p, jnp.float32).reshape(1, N)
        if n_pad:
            p = jnp.pad(p, ((0, 0), (0, n_pad)))
        return p

    rg = pad_row(reset_gamma)
    tg = pad_row(thr_gamma)
    u0p = pad_row(jnp.zeros((N,), jnp.float32) if u0 is None else u0)
    b0p = pad_row(jnp.zeros((N,), jnp.float32) if b0 is None else b0)
    if n_pad:
        x = jnp.pad(x, ((0, 0), (0, 0), (0, n_pad)))

    TT = _pick_time_tile(T, time_block)
    BT = _pick_batch_tile(B, TT, Np, vmem_budget_bytes)
    grid = (B // BT, T // TT)

    kernel = functools.partial(
        _full_spike_kernel,
        reset_alpha=float(reset_alpha),
        thr_alpha=float(thr_alpha),
        refractory_period=float(refractory_period),
        tt=TT,
    )

    param_spec = pl.BlockSpec((1, Np), lambda bi, ti: (0, 0))

    z = pl.pallas_call(
        kernel,
        # TODO(synk): z values are exactly 0/1; a bf16 output would halve the
        # write stream if downstream consumers accept bf16 (kept f32 here to
        # match the module's output dtype).
        out_shape=jax.ShapeDtypeStruct((B, T, Np), jnp.float32),
        grid_spec=pltpu.PrefetchScalarGridSpec(
            num_scalar_prefetch=0,
            grid=grid,
            in_specs=[
                pl.BlockSpec((BT, TT, Np), lambda bi, ti: (bi, ti, 0)),  # x
                param_spec,   # reset_gamma
                param_spec,   # thr_gamma
                param_spec,   # u0
                param_spec,   # b0
            ],
            out_specs=pl.BlockSpec((BT, TT, Np), lambda bi, ti: (bi, ti, 0)),
            scratch_shapes=[
                pltpu.VMEM((BT, Np), jnp.float32),   # u
                pltpu.VMEM((BT, Np), jnp.float32),   # b
                pltpu.VMEM((BT, Np), jnp.float32),   # q (float counter)
                pltpu.VMEM((BT, Np), jnp.float32),   # last_z
            ],
        ),
        compiler_params=pltpu.CompilerParams(
            # Batch blocks are independent -> shard across v7x's 2 TCs;
            # time blocks carry state -> sequential.
            dimension_semantics=("parallel", "arbitrary"),
        ),
    )(x, rg, tg, u0p, b0p)

    if n_pad:
        z = z[:, :, :N]
    return z


def _reference_forward(x, reset_gamma, thr_gamma,
                       reset_alpha=0.9, thr_alpha=0.95, refractory_period=5):
    """Pure-JAX reference mirroring the PyTorch loop (int refractory counter)."""
    B, T, N = x.shape
    al, bet = reset_alpha, thr_alpha

    def step(carry, xt):
        u, b, q, last_z = carry
        reset = last_z * reset_gamma[None, :]
        u = al * u + (1 - al) * xt - reset
        z = jnp.where((u - b) > 0, 1.0, 0.0)
        z = jnp.where(q == 0, z, 0.0)
        q = jnp.maximum(0, q - 1) + refractory_period * z.astype(jnp.int32)
        b = bet * b + (1 - bet) * z * thr_gamma[None, :]
        return (u, b, q, z), z

    init = (jnp.zeros((B, N), jnp.float32), jnp.zeros((B, N), jnp.float32),
            jnp.zeros((B, N), jnp.int32), jnp.zeros((B, N), jnp.float32))
    _, zs = jax.lax.scan(step, init, jnp.transpose(x, (1, 0, 2)))
    return jnp.transpose(zs, (1, 0, 2))


if __name__ == "__main__":
    key = jax.random.PRNGKey(0)

    # Case 1: small canonical shape (B, T, N) = (2, 8, 32); scaled so spikes fire.
    B, T, N = 2, 8, 32
    k1, k2 = jax.random.split(key)
    x1 = jax.random.normal(k1, (B, T, N), dtype=jnp.float32) * 3.0
    rg1 = jnp.ones((N,), jnp.float32)   # nn.Parameter(torch.ones(n_neurons))
    tg1 = jnp.ones((N,), jnp.float32)

    z1 = jax.block_until_ready(full_spike_forward(x1, rg1, tg1))
    z1_ref = _reference_forward(x1, rg1, tg1)
    assert z1.shape == (B, T, N)
    assert jnp.allclose(z1, z1_ref, atol=1e-6), "case-1 mismatch vs reference"

    # Case 2: exercises lane padding (N not multiple of 128) and multi-time-block
    # carry of the recurrence state across grid steps.
    B2, T2, N2 = 3, 48, 130
    x2 = jax.random.normal(k2, (B2, T2, N2), dtype=jnp.float32) * 3.0
    rg2 = jnp.ones((N2,), jnp.float32)
    tg2 = jnp.ones((N2,), jnp.float32)

    z2 = jax.block_until_ready(full_spike_forward(x2, rg2, tg2))
    z2_ref = _reference_forward(x2, rg2, tg2)
    assert z2.shape == (B2, T2, N2)
    assert jnp.allclose(z2, z2_ref, atol=1e-6), "case-2 mismatch vs reference"

    # TODO(synk): training-mode EMA update of the u0/b0 buffers (nn.Module
    # buffer mutation) is intentionally not emulated (eval-mode forward).
    print("KERNEL_OK")
</pallas_src>

<mosaic_0001>
module attributes {stable_mosaic.version = 11 : i64} {
  func.func @_full_spike_kernel(%arg0: i32, %arg1: i32, %arg2: memref<2x8x128xf32, #tpu.memory_space<vmem>>, %arg3: memref<1x128xf32, #tpu.memory_space<vmem>>, %arg4: memref<1x128xf32, #tpu.memory_space<vmem>>, %arg5: memref<1x128xf32, #tpu.memory_space<vmem>>, %arg6: memref<1x128xf32, #tpu.memory_space<vmem>>, %arg7: memref<2x8x128xf32, #tpu.memory_space<vmem>>, %arg8: memref<2x128xf32, #tpu.memory_space<vmem>>, %arg9: memref<2x128xf32, #tpu.memory_space<vmem>>, %arg10: memref<2x128xf32, #tpu.memory_space<vmem>>, %arg11: memref<2x128xf32, #tpu.memory_space<vmem>>) attributes {dimension_semantics = [#tpu.dimension_semantics<parallel>, #tpu.dimension_semantics<arbitrary>], iteration_bounds = array<i64: 1, 1>, scalar_prefetch = 0 : i64, scratch_operands = 4 : i64, tpu.core_type = #tpu.core_type<tc>, window_params = [{transform_indices = @transform_0, window_bounds = array<i64: 2, 8, 128>}, {pipeline_mode = #tpu.pipeline_mode<synchronous>, transform_indices = @transform_1, window_bounds = array<i64: 1, 128>}, {pipeline_mode = #tpu.pipeline_mode<synchronous>, transform_indices = @transform_2, window_bounds = array<i64: 1, 128>}, {pipeline_mode = #tpu.pipeline_mode<synchronous>, transform_indices = @transform_3, window_bounds = array<i64: 1, 128>}, {pipeline_mode = #tpu.pipeline_mode<synchronous>, transform_indices = @transform_4, window_bounds = array<i64: 1, 128>}, {transform_indices = @transform_5, window_bounds = array<i64: 2, 8, 128>}]} {
    %c0_i32 = arith.constant 0 : i32
    %0 = arith.cmpi eq, %arg1, %c0_i32 : i32
    %1 = arith.extui %0 : i1 to i32
    %c0_i32_0 = arith.constant 0 : i32
    %2 = arith.cmpi ne, %1, %c0_i32_0 : i32
    scf.if %2 {
      %c0_132 = arith.constant 0 : index
      %c0_133 = arith.constant 0 : index
      %281 = vector.load %arg5[%c0_132, %c0_133] : memref<1x128xf32, #tpu.memory_space<vmem>>, vector<1x128xf32>
      %282 = vector.shape_cast %281 : vector<1x128xf32> to vector<1x128xf32>
      %283 = vector.broadcast %282 : vector<1x128xf32> to vector<2x128xf32>
      %c0_134 = arith.constant 0 : index
      %c0_135 = arith.constant 0 : index
      %284 = vector.load %arg8[%c0_134, %c0_135] : memref<2x128xf32, #tpu.memory_space<vmem>>, vector<2x128xf32>
      tpu.vector_store %arg8[%c0_134, %c0_135], %283 {strides = array<i32>} : memref<2x128xf32, #tpu.memory_space<vmem>>, vector<2x128xf32>,
      %c0_136 = arith.constant 0 : index
      %c0_137 = arith.constant 0 : index
      %285 = vector.load %arg6[%c0_136, %c0_137] : memref<1x128xf32, #tpu.memory_space<vmem>>, vector<1x128xf32>
      %286 = vector.shape_cast %285 : vector<1x128xf32> to vector<1x128xf32>
      %287 = vector.broadcast %286 : vector<1x128xf32> to vector<2x128xf32>
      %c0_138 = arith.constant 0 : index
      %c0_139 = arith.constant 0 : index
      %288 = vector.load %arg9[%c0_138, %c0_139] : memref<2x128xf32, #tpu.memory_space<vmem>>, vector<2x128xf32>
      tpu.vector_store %arg9[%c0_138, %c0_139], %287 {strides = array<i32>} : memref<2x128xf32, #tpu.memory_space<vmem>>, vector<2x128xf32>,
      %cst_140 = arith.constant 0.000000e+00 : f32
      %289 = vector.broadcast %cst_140 : f32 to vector<2x128xf32>
      %c0_141 = arith.constant 0 : index
      %c0_142 = arith.constant 0 : index
      %290 = vector.load %arg10[%c0_141, %c0_142] : memref<2x128xf32, #tpu.memory_space<vmem>>, vector<2x128xf32>
      tpu.vector_store %arg10[%c0_141, %c0_142], %289 {strides = array<i32>} : memref<2x128xf32, #tpu.memory_space<vmem>>, vector<2x128xf32>,
      %cst_143 = arith.constant 0.000000e+00 : f32
      %291 = vector.broadcast %cst_143 : f32 to vector<2x128xf32>
      %c0_144 = arith.constant 0 : index
      %c0_145 = arith.constant 0 : index
      %292 = vector.load %arg11[%c0_144, %c0_145] : memref<2x128xf32, #tpu.memory_space<vmem>>, vector<2x128xf32>
      tpu.vector_store %arg11[%c0_144, %c0_145], %291 {strides = array<i32>} : memref<2x128xf32, #tpu.memory_space<vmem>>, vector<2x128xf32>,
    } else {
    }
    %c0 = arith.constant 0 : index
    %c0_1 = arith.constant 0 : index
    %3 = vector.load %arg3[%c0, %c0_1] : memref<1x128xf32, #tpu.memory_space<vmem>>, vector<1x128xf32>
    %4 = vector.shape_cast %3 : vector<1x128xf32> to vector<1x128xf32>
    %5 = vector.broadcast %4 : vector<1x128xf32> to vector<2x128xf32>
    %c0_2 = arith.constant 0 : index
    %c0_3 = arith.constant 0 : index
    %6 = vector.load %arg4[%c0_2, %c0_3] : memref<1x128xf32, #tpu.memory_space<vmem>>, vector<1x128xf32>
    %7 = vector.shape_cast %6 : vector<1x128xf32> to vector<1x128xf32>
    %8 = vector.broadcast %7 : vector<1x128xf32> to vector<2x128xf32>
    %c0_4 = arith.constant 0 : index
    %c0_5 = arith.constant 0 : index
    %9 = vector.load %arg8[%c0_4, %c0_5] : memref<2x128xf32, #tpu.memory_space<vmem>>, vector<2x128xf32>
    %c0_6 = arith.constant 0 : index
    %c0_7 = arith.constant 0 : index
    %10 = vector.load %arg9[%c0_6, %c0_7] : memref<2x128xf32, #tpu.memory_space<vmem>>, vector<2x128xf32>
    %c0_8 = arith.constant 0 : index
    %c0_9 = arith.constant 0 : index
    %11 = vector.load %arg10[%c0_8, %c0_9] : memref<2x128xf32, #tpu.memory_space<vmem>>, vector<2x128xf32>
    %c0_10 = arith.constant 0 : index
    %c0_11 = arith.constant 0 : index
    %12 = vector.load %arg11[%c0_10, %c0_11] : memref<2x128xf32, #tpu.memory_space<vmem>>, vector<2x128xf32>
    %c0_12 = arith.constant 0 : index
    %c0_13 = arith.constant 0 : index
    %c0_14 = arith.constant 0 : index
    %13 = vector.load %arg2[%c0_12, %c0_13, %c0_14] : memref<2x8x128xf32, #tpu.memory_space<vmem>>, vector<2x1x128xf32>
    %14 = vector.shape_cast %13 : vector<2x1x128xf32> to vector<2x128xf32>
    %cst = arith.constant 0.899999976 : f32
    %15 = vector.broadcast %cst : f32 to vector<2x128xf32>
    %16 = arith.mulf %15, %9 : vector<2x128xf32>
    %cst_15 = arith.constant 1.000000e-01 : f32
    %17 = vector.broadcast %cst_15 : f32 to vector<2x128xf32>
    %18 = arith.mulf %17, %14 : vector<2x128xf32>
    %19 = arith.addf %16, %18 : vector<2x128xf32>
    %20 = arith.mulf %12, %5 : vector<2x128xf32>
    %21 = arith.subf %19, %20 : vector<2x128xf32>
    %22 = arith.subf %21, %10 : vector<2x128xf32>
    %cst_16 = arith.constant 0.000000e+00 : f32
    %23 = vector.broadcast %cst_16 : f32 to vector<2x128xf32>
    %24 = arith.cmpf ogt, %22, %23 : vector<2x128xf32>
    %cst_17 = arith.constant 0.000000e+00 : f32
    %25 = vector.broadcast %cst_17 : f32 to vector<2x128xf32>
    %26 = arith.cmpf ole, %11, %25 : vector<2x128xf32>
    %27 = arith.andi %24, %26 : vector<2x128xi1>
    %28 = arith.extui %27 : vector<2x128xi1> to vector<2x128xi32>
    %29 = arith.sitofp %28 : vector<2x128xi32> to vector<2x128xf32>
    %cst_18 = arith.constant 1.000000e+00 : f32
    %30 = vector.broadcast %cst_18 : f32 to vector<2x128xf32>
    %31 = arith.subf %11, %30 : vector<2x128xf32>
    %cst_19 = arith.constant 0.000000e+00 : f32
    %32 = vector.broadcast %cst_19 : f32 to vector<2x128xf32>
    %33 = arith.maximumf %31, %32 : vector<2x128xf32>
    %cst_20 = arith.constant 5.000000e+00 : f32
    %34 = vector.broadcast %cst_20 : f32 to vector<2x128xf32>
    %35 = arith.mulf %34, %29 : vector<2x128xf32>
    %36 = arith.addf %33, %35 : vector<2x128xf32>
    %cst_21 = arith.constant 0.949999988 : f32
    %37 = vector.broadcast %cst_21 : f32 to vector<2x128xf32>
    %38 = arith.mulf %37, %10 : vector<2x128xf32>
    %cst_22 = arith.constant 5.000000e-02 : f32
    %39 = vector.broadcast %cst_22 : f32 to vector<2x128xf32>
    %40 = arith.mulf %39, %29 : vector<2x128xf32>
    %41 = arith.mulf %40, %8 : vector<2x128xf32>
    %42 = arith.addf %38, %41 : vector<2x128xf32>
    %c0_23 = arith.constant 0 : index
    %c0_24 = arith.constant 0 : index
    %c0_25 = arith.constant 0 : index
    %43 = vector.load %arg7[%c0_23, %c0_24, %c0_25] : memref<2x8x128xf32, #tpu.memory_space<vmem>>, vector<2x1x128xf32>
    %44 = vector.shape_cast %43 : vector<2x1x128xf32> to vector<2x128xf32>
    %45 = vector.shape_cast %29 : vector<2x128xf32> to vector<2x1x128xf32>
    tpu.vector_store %arg7[%c0_23, %c0_24, %c0_25], %45 {strides = array<i32>} : memref<2x8x128xf32, #tpu.memory_space<vmem>>, vector<2x1x128xf32>,
    %c0_26 = arith.constant 0 : index
    %c1 = arith.constant 1 : index
    %c0_27 = arith.constant 0 : index
    %46 = vector.load %arg2[%c0_26, %c1, %c0_27] : memref<2x8x128xf32, #tpu.memory_space<vmem>>, vector<2x1x128xf32>
    %47 = vector.shape_cast %46 : vector<2x1x128xf32> to vector<2x128xf32>
    %cst_28 = arith.constant 0.899999976 : f32
    %48 = vector.broadcast %cst_28 : f32 to vector<2x128xf32>
    %49 = arith.mulf %48, %21 : vector<2x128xf32>
    %cst_29 = arith.constant 1.000000e-01 : f32
    %50 = vector.broadcast %cst_29 : f32 to vector<2x128xf32>
    %51 = arith.mulf %50, %47 : vector<2x128xf32>
    %52 = arith.addf %49, %51 : vector<2x128xf32>
    %53 = arith.mulf %29, %5 : vector<2x128xf32>
    %54 = arith.subf %52, %53 : vector<2x128xf32>
    %55 = arith.subf %54, %42 : vector<2x128xf32>
    %cst_30 = arith.constant 0.000000e+00 : f32
    %56 = vector.broadcast %cst_30 : f32 to vector<2x128xf32>
    %57 = arith.cmpf ogt, %55, %56 : vector<2x128xf32>
    %cst_31 = arith.constant 0.000000e+00 : f32
    %58 = vector.broadcast %cst_31 : f32 to vector<2x128xf32>
    %59 = arith.cmpf ole, %36, %58 : vector<2x128xf32>
    %60 = arith.andi %57, %59 : vector<2x128xi1>
    %61 = arith.extui %60 : vector<2x128xi1> to vector<2x128xi32>
    %62 = arith.sitofp %61 : vector<2x128xi32> to vector<2x128xf32>
    %cst_32 = arith.constant 1.000000e+00 : f32
    %63 = vector.broadcast %cst_32 : f32 to vector<2x128xf32>
    %64 = arith.subf %36, %63 : vector<2x128xf32>
    %cst_33 = arith.constant 0.000000e+00 : f32
    %65 = vector.broadcast %cst_33 : f32 to vector<2x128xf32>
    %66 = arith.maximumf %64, %65 : vector<2x128xf32>
    %cst_34 = arith.constant 5.000000e+00 : f32
    %67 = vector.broadcast %cst_34 : f32 to vector<2x128xf32>
    %68 = arith.mulf %67, %62 : vector<2x128xf32>
    %69 = arith.addf %66, %68 : vector<2x128xf32>
    %cst_35 = arith.constant 0.949999988 : f32
    %70 = vector.broadcast %cst_35 : f32 to vector<2x128xf32>
    %71 = arith.mulf %70, %42 : vector<2x128xf32>
    %cst_36 = arith.constant 5.000000e-02 : f32
    %72 = vector.broadcast %cst_36 : f32 to vector<2x128xf32>
    %73 = arith.mulf %72, %62 : vector<2x128xf32>
    %74 = arith.mulf %73, %8 : vector<2x128xf32>
    %75 = arith.addf %71, %74 : vector<2x128xf32>
    %c0_37 = arith.constant 0 : index
    %c1_38 = arith.constant 1 : index
    %c0_39 = arith.constant 0 : index
    %76 = vector.load %arg7[%c0_37, %c1_38, %c0_39] : memref<2x8x128xf32, #tpu.memory_space<vmem>>, vector<2x1x128xf32>
    %77 = vector.shape_cast %76 : vector<2x1x128xf32> to vector<2x128xf32>
    %78 = vector.shape_cast %62 : vector<2x128xf32> to vector<2x1x128xf32>
    tpu.vector_store %arg7[%c0_37, %c1_38, %c0_39], %78 {strides = array<i32>} : memref<2x8x128xf32, #tpu.memory_space<vmem>>, vector<2x1x128xf32>,
    %c0_40 = arith.constant 0 : index
    %c2 = arith.constant 2 : index
    %c0_41 = arith.constant 0 : index
    %79 = vector.load %arg2[%c0_40, %c2, %c0_41] : memref<2x8x128xf32, #tpu.memory_space<vmem>>, vector<2x1x128xf32>
    %80 = vector.shape_cast %79 : vector<2x1x128xf32> to vector<2x128xf32>
    %cst_42 = arith.constant 0.899999976 : f32
    %81 = vector.broadcast %cst_42 : f32 to vector<2x128xf32>
    %82 = arith.mulf %81, %54 : vector<2x128xf32>
    %cst_43 = arith.constant 1.000000e-01 : f32
    %83 = vector.broadcast %cst_43 : f32 to vector<2x128xf32>
    %84 = arith.mulf %83, %80 : vector<2x128xf32>
    %85 = arith.addf %82, %84 : vector<2x128xf32>
    %86 = arith.mulf %62, %5 : vector<2x128xf32>
    %87 = arith.subf %85, %86 : vector<2x128xf32>
    %88 = arith.subf %87, %75 : vector<2x128xf32>
    %cst_44 = arith.constant 0.000000e+00 : f32
    %89 = vector.broadcast %cst_44 : f32 to vector<2x128xf32>
    %90 = arith.cmpf ogt, %88, %89 : vector<2x128xf32>
    %cst_45 = arith.constant 0.000000e+00 : f32
    %91 = vector.broadcast %cst_45 : f32 to vector<2x128xf32>
    %92 = arith.cmpf ole, %69, %91 : vector<2x128xf32>
    %93 = arith.andi %90, %92 : vector<2x128xi1>
    %94 = arith.extui %93 : vector<2x128xi1> to vector<2x128xi32>
    %95 = arith.sitofp %94 : vector<2x128xi32> to vector<2x128xf32>
    %cst_46 = arith.constant 1.000000e+00 : f32
    %96 = vector.broadcast %cst_46 : f32 to vector<2x128xf32>
    %97 = arith.subf %69, %96 : vector<2x128xf32>
    %cst_47 = arith.constant 0.000000e+00 : f32
    %98 = vector.broadcast %cst_47 : f32 to vector<2x128xf32>
    %99 = arith.maximumf %97, %98 : vector<2x128xf32>
    %cst_48 = arith.constant 5.000000e+00 : f32
    %100 = vector.broadcast %cst_48 : f32 to vector<2x128xf32>
    %101 = arith.mulf %100, %95 : vector<2x128xf32>
    %102 = arith.addf %99, %101 : vector<2x128xf32>
    %cst_49 = arith.constant 0.949999988 : f32
    %103 = vector.broadcast %cst_49 : f32 to vector<2x128xf32>
    %104 = arith.mulf %103, %75 : vector<2x128xf32>
    %cst_50 = arith.constant 5.000000e-02 : f32
    %105 = vector.broadcast %cst_50 : f32 to vector<2x128xf32>
    %106 = arith.mulf %105, %95 : vector<2x128xf32>
    %107 = arith.mulf %106, %8 : vector<2x128xf32>
    %108 = arith.addf %104, %107 : vector<2x128xf32>
    %c0_51 = arith.constant 0 : index
    %c2_52 = arith.constant 2 : index
    %c0_53 = arith.constant 0 : index
    %109 = vector.load %arg7[%c0_51, %c2_52, %c0_53] : memref<2x8x128xf32, #tpu.memory_space<vmem>>, vector<2x1x128xf32>
    %110 = vector.shape_cast %109 : vector<2x1x128xf32> to vector<2x128xf32>
    %111 = vector.shape_cast %95 : vector<2x128xf32> to vector<2x1x128xf32>
    tpu.vector_store %arg7[%c0_51, %c2_52, %c0_53], %111 {strides = array<i32>} : memref<2x8x128xf32, #tpu.memory_space<vmem>>, vector<2x1x128xf32>,
    %c0_54 = arith.constant 0 : index
    %c3 = arith.constant 3 : index
    %c0_55 = arith.constant 0 : index
    %112 = vector.load %arg2[%c0_54, %c3, %c0_55] : memref<2x8x128xf32, #tpu.memory_space<vmem>>, vector<2x1x128xf32>
    %113 = vector.shape_cast %112 : vector<2x1x128xf32> to vector<2x128xf32>
    %cst_56 = arith.constant 0.899999976 : f32
    %114 = vector.broadcast %cst_56 : f32 to vector<2x128xf32>
    %115 = arith.mulf %114, %87 : vector<2x128xf32>
    %cst_57 = arith.constant 1.000000e-01 : f32
    %116 = vector.broadcast %cst_57 : f32 to vector<2x128xf32>
    %117 = arith.mulf %116, %113 : vector<2x128xf32>
    %118 = arith.addf %115, %117 : vector<2x128xf32>
    %119 = arith.mulf %95, %5 : vector<2x128xf32>
    %120 = arith.subf %118, %119 : vector<2x128xf32>
    %121 = arith.subf %120, %108 : vector<2x128xf32>
    %cst_58 = arith.constant 0.000000e+00 : f32
    %122 = vector.broadcast %cst_58 : f32 to vector<2x128xf32>
    %123 = arith.cmpf ogt, %121, %122 : vector<2x128xf32>
    %cst_59 = arith.constant 0.000000e+00 : f32
    %124 = vector.broadcast %cst_59 : f32 to vector<2x128xf32>
    %125 = arith.cmpf ole, %102, %124 : vector<2x128xf32>
    %126 = arith.andi %123, %125 : vector<2x128xi1>
    %127 = arith.extui %126 : vector<2x128xi1> to vector<2x128xi32>
    %128 = arith.sitofp %127 : vector<2x128xi32> to vector<2x128xf32>
    %cst_60 = arith.constant 1.000000e+00 : f32
    %129 = vector.broadcast %cst_60 : f32 to vector<2x128xf32>
    %130 = arith.subf %102, %129 : vector<2x128xf32>
    %cst_61 = arith.constant 0.000000e+00 : f32
    %131 = vector.broadcast %cst_61 : f32 to vector<2x128xf32>
    %132 = arith.maximumf %130, %131 : vector<2x128xf32>
    %cst_62 = arith.constant 5.000000e+00 : f32
    %133 = vector.broadcast %cst_62 : f32 to vector<2x128xf32>
    %134 = arith.mulf %133, %128 : vector<2x128xf32>
    %135 = arith.addf %132, %134 : vector<2x128xf32>
    %cst_63 = arith.constant 0.949999988 : f32
    %136 = vector.broadcast %cst_63 : f32 to vector<2x128xf32>
    %137 = arith.mulf %136, %108 : vector<2x128xf32>
    %cst_64 = arith.constant 5.000000e-02 : f32
    %138 = vector.broadcast %cst_64 : f32 to vector<2x128xf32>
    %139 = arith.mulf %138, %128 : vector<2x128xf32>
    %140 = arith.mulf %139, %8 : vector<2x128xf32>
    %141 = arith.addf %137, %140 : vector<2x128xf32>
    %c0_65 = arith.constant 0 : index
    %c3_66 = arith.constant 3 : index
    %c0_67 = arith.constant 0 : index
    %142 = vector.load %arg7[%c0_65, %c3_66, %c0_67] : memref<2x8x128xf32, #tpu.memory_space<vmem>>, vector<2x1x128xf32>
    %143 = vector.shape_cast %142 : vector<2x1x128xf32> to vector<2x128xf32>
    %144 = vector.shape_cast %128 : vector<2x128xf32> to vector<2x1x128xf32>
    tpu.vector_store %arg7[%c0_65, %c3_66, %c0_67], %144 {strides = array<i32>} : memref<2x8x128xf32, #tpu.memory_space<vmem>>, vector<2x1x128xf32>,
    %c0_68 = arith.constant 0 : index
    %c4 = arith.constant 4 : index
    %c0_69 = arith.constant 0 : index
    %145 = vector.load %arg2[%c0_68, %c4, %c0_69] : memref<2x8x128xf32, #tpu.memory_space<vmem>>, vector<2x1x128xf32>
    %146 = vector.shape_cast %145 : vector<2x1x128xf32> to vector<2x128xf32>
    %cst_70 = arith.constant 0.899999976 : f32
    %147 = vector.broadcast %cst_70 : f32 to vector<2x128xf32>
    %148 = arith.mulf %147, %120 : vector<2x128xf32>
    %cst_71 = arith.constant 1.000000e-01 : f32
    %149 = vector.broadcast %cst_71 : f32 to vector<2x128xf32>
    %150 = arith.mulf %149, %146 : vector<2x128xf32>
    %151 = arith.addf %148, %150 : vector<2x128xf32>
    %152 = arith.mulf %128, %5 : vector<2x128xf32>
    %153 = arith.subf %151, %152 : vector<2x128xf32>
    %154 = arith.subf %153, %141 : vector<2x128xf32>
    %cst_72 = arith.constant 0.000000e+00 : f32
    %155 = vector.broadcast %cst_72 : f32 to vector<2x128xf32>
    %156 = arith.cmpf ogt, %154, %155 : vector<2x128xf32>
    %cst_73 = arith.constant 0.000000e+00 : f32
    %157 = vector.broadcast %cst_73 : f32 to vector<2x128xf32>
    %158 = arith.cmpf ole, %135, %157 : vector<2x128xf32>
    %159 = arith.andi %156, %158 : vector<2x128xi1>
    %160 = arith.extui %159 : vector<2x128xi1> to vector<2x128xi32>
    %161 = arith.sitofp %160 : vector<2x128xi32> to vector<2x128xf32>
    %cst_74 = arith.constant 1.000000e+00 : f32
    %162 = vector.broadcast %cst_74 : f32 to vector<2x128xf32>
    %163 = arith.subf %135, %162 : vector<2x128xf32>
    %cst_75 = arith.constant 0.000000e+00 : f32
    %164 = vector.broadcast %cst_75 : f32 to vector<2x128xf32>
    %165 = arith.maximumf %163, %164 : vector<2x128xf32>
    %cst_76 = arith.constant 5.000000e+00 : f32
    %166 = vector.broadcast %cst_76 : f32 to vector<2x128xf32>
    %167 = arith.mulf %166, %161 : vector<2x128xf32>
    %168 = arith.addf %165, %167 : vector<2x128xf32>
    %cst_77 = arith.constant 0.949999988 : f32
    %169 = vector.broadcast %cst_77 : f32 to vector<2x128xf32>
    %170 = arith.mulf %169, %141 : vector<2x128xf32>
    %cst_78 = arith.constant 5.000000e-02 : f32
    %171 = vector.broadcast %cst_78 : f32 to vector<2x128xf32>
    %172 = arith.mulf %171, %161 : vector<2x128xf32>
    %173 = arith.mulf %172, %8 : vector<2x128xf32>
    %174 = arith.addf %170, %173 : vector<2x128xf32>
    %c0_79 = arith.constant 0 : index
    %c4_80 = arith.constant 4 : index
    %c0_81 = arith.constant 0 : index
    %175 = vector.load %arg7[%c0_79, %c4_80, %c0_81] : memref<2x8x128xf32, #tpu.memory_space<vmem>>, vector<2x1x128xf32>
    %176 = vector.shape_cast %175 : vector<2x1x128xf32> to vector<2x128xf32>
    %177 = vector.shape_cast %161 : vector<2x128xf32> to vector<2x1x128xf32>
    tpu.vector_store %arg7[%c0_79, %c4_80, %c0_81], %177 {strides = array<i32>} : memref<2x8x128xf32, #tpu.memory_space<vmem>>, vector<2x1x128xf32>,
    %c0_82 = arith.constant 0 : index
    %c5 = arith.constant 5 : index
    %c0_83 = arith.constant 0 : index
    %178 = vector.load %arg2[%c0_82, %c5, %c0_83] : memref<2x8x128xf32, #tpu.memory_space<vmem>>, vector<2x1x128xf32>
    %179 = vector.shape_cast %178 : vector<2x1x128xf32> to vector<2x128xf32>
    %cst_84 = arith.constant 0.899999976 : f32
    %180 = vector.broadcast %cst_84 : f32 to vector<2x128xf32>
    %181 = arith.mulf %180, %153 : vector<2x128xf32>
    %cst_85 = arith.constant 1.000000e-01 : f32
    %182 = vector.broadcast %cst_85 : f32 to vector<2x128xf32>
    %183 = arith.mulf %182, %179 : vector<2x128xf32>
    %184 = arith.addf %181, %183 : vector<2x128xf32>
    %185 = arith.mulf %161, %5 : vector<2x128xf32>
    %186 = arith.subf %184, %185 : vector<2x128xf32>
    %187 = arith.subf %186, %174 : vector<2x128xf32>
    %cst_86 = arith.constant 0.000000e+00 : f32
    %188 = vector.broadcast %cst_86 : f32 to vector<2x128xf32>
    %189 = arith.cmpf ogt, %187, %188 : vector<2x128xf32>
    %cst_87 = arith.constant 0.000000e+00 : f32
    %190 = vector.broadcast %cst_87 : f32 to vector<2x128xf32>
    %191 = arith.cmpf ole, %168, %190 : vector<2x128xf32>
    %192 = arith.andi %189, %191 : vector<2x128xi1>
    %193 = arith.extui %192 : vector<2x128xi1> to vector<2x128xi32>
    %194 = arith.sitofp %193 : vector<2x128xi32> to vector<2x128xf32>
    %cst_88 = arith.constant 1.000000e+00 : f32
    %195 = vector.broadcast %cst_88 : f32 to vector<2x128xf32>
    %196 = arith.subf %168, %195 : vector<2x128xf32>
    %cst_89 = arith.constant 0.000000e+00 : f32
    %197 = vector.broadcast %cst_89 : f32 to vector<2x128xf32>
    %198 = arith.maximumf %196, %197 : vector<2x128xf32>
    %cst_90 = arith.constant 5.000000e+00 : f32
    %199 = vector.broadcast %cst_90 : f32 to vector<2x128xf32>
    %200 = arith.mulf %199, %194 : vector<2x128xf32>
    %201 = arith.addf %198, %200 : vector<2x128xf32>
    %cst_91 = arith.constant 0.949999988 : f32
    %202 = vector.broadcast %cst_91 : f32 to vector<2x128xf32>
    %203 = arith.mulf %202, %174 : vector<2x128xf32>
    %cst_92 = arith.constant 5.000000e-02 : f32
    %204 = vector.broadcast %cst_92 : f32 to vector<2x128xf32>
    %205 = arith.mulf %204, %194 : vector<2x128xf32>
    %206 = arith.mulf %205, %8 : vector<2x128xf32>
    %207 = arith.addf %203, %206 : vector<2x128xf32>
    %c0_93 = arith.constant 0 : index
    %c5_94 = arith.constant 5 : index
    %c0_95 = arith.constant 0 : index
    %208 = vector.load %arg7[%c0_93, %c5_94, %c0_95] : memref<2x8x128xf32, #tpu.memory_space<vmem>>, vector<2x1x128xf32>
    %209 = vector.shape_cast %208 : vector<2x1x128xf32> to vector<2x128xf32>
    %210 = vector.shape_cast %194 : vector<2x128xf32> to vector<2x1x128xf32>
    tpu.vector_store %arg7[%c0_93, %c5_94, %c0_95], %210 {strides = array<i32>} : memref<2x8x128xf32, #tpu.memory_space<vmem>>, vector<2x1x128xf32>,
    %c0_96 = arith.constant 0 : index
    %c6 = arith.constant 6 : index
    %c0_97 = arith.constant 0 : index
    %211 = vector.load %arg2[%c0_96, %c6, %c0_97] : memref<2x8x128xf32, #tpu.memory_space<vmem>>, vector<2x1x128xf32>
    %212 = vector.shape_cast %211 : vector<2x1x128xf32> to vector<2x128xf32>
    %cst_98 = arith.constant 0.899999976 : f32
    %213 = vector.broadcast %cst_98 : f32 to vector<2x128xf32>
    %214 = arith.mulf %213, %186 : vector<2x128xf32>
    %cst_99 = arith.constant 1.000000e-01 : f32
    %215 = vector.broadcast %cst_99 : f32 to vector<2x128xf32>
    %216 = arith.mulf %215, %212 : vector<2x128xf32>
    %217 = arith.addf %214, %216 : vector<2x128xf32>
    %218 = arith.mulf %194, %5 : vector<2x128xf32>
    %219 = arith.subf %217, %218 : vector<2x128xf32>
    %220 = arith.subf %219, %207 : vector<2x128xf32>
    %cst_100 = arith.constant 0.000000e+00 : f32
    %221 = vector.broadcast %cst_100 : f32 to vector<2x128xf32>
    %222 = arith.cmpf ogt, %220, %221 : vector<2x128xf32>
    %cst_101 = arith.constant 0.000000e+00 : f32
    %223 = vector.broadcast %cst_101 : f32 to vector<2x128xf32>
    %224 = arith.cmpf ole, %201, %223 : vector<2x128xf32>
    %225 = arith.andi %222, %224 : vector<2x128xi1>
    %226 = arith.extui %225 : vector<2x128xi1> to vector<2x128xi32>
    %227 = arith.sitofp %226 : vector<2x128xi32> to vector<2x128xf32>
    %cst_102 = arith.constant 1.000000e+00 : f32
    %228 = vector.broadcast %cst_102 : f32 to vector<2x128xf32>
    %229 = arith.subf %201, %228 : vector<2x128xf32>
    %cst_103 = arith.constant 0.000000e+00 : f32
    %230 = vector.broadcast %cst_103 : f32 to vector<2x128xf32>
    %231 = arith.maximumf %229, %230 : vector<2x128xf32>
    %cst_104 = arith.constant 5.000000e+00 : f32
    %232 = vector.broadcast %cst_104 : f32 to vector<2x128xf32>
    %233 = arith.mulf %232, %227 : vector<2x128xf32>
    %234 = arith.addf %231, %233 : vector<2x128xf32>
    %cst_105 = arith.constant 0.949999988 : f32
    %235 = vector.broadcast %cst_105 : f32 to vector<2x128xf32>
    %236 = arith.mulf %235, %207 : vector<2x128xf32>
    %cst_106 = arith.constant 5.000000e-02 : f32
    %237 = vector.broadcast %cst_106 : f32 to vector<2x128xf32>
    %238 = arith.mulf %237, %227 : vector<2x128xf32>
    %239 = arith.mulf %238, %8 : vector<2x128xf32>
    %240 = arith.addf %236, %239 : vector<2x128xf32>
    %c0_107 = arith.constant 0 : index
    %c6_108 = arith.constant 6 : index
    %c0_109 = arith.constant 0 : index
    %241 = vector.load %arg7[%c0_107, %c6_108, %c0_109] : memref<2x8x128xf32, #tpu.memory_space<vmem>>, vector<2x1x128xf32>
    %242 = vector.shape_cast %241 : vector<2x1x128xf32> to vector<2x128xf32>
    %243 = vector.shape_cast %227 : vector<2x128xf32> to vector<2x1x128xf32>
    tpu.vector_store %arg7[%c0_107, %c6_108, %c0_109], %243 {strides = array<i32>} : memref<2x8x128xf32, #tpu.memory_space<vmem>>, vector<2x1x128xf32>,
    %c0_110 = arith.constant 0 : index
    %c7 = arith.constant 7 : index
    %c0_111 = arith.constant 0 : index
    %244 = vector.load %arg2[%c0_110, %c7, %c0_111] : memref<2x8x128xf32, #tpu.memory_space<vmem>>, vector<2x1x128xf32>
    %245 = vector.shape_cast %244 : vector<2x1x128xf32> to vector<2x128xf32>
    %cst_112 = arith.constant 0.899999976 : f32
    %246 = vector.broadcast %cst_112 : f32 to vector<2x128xf32>
    %247 = arith.mulf %246, %219 : vector<2x128xf32>
    %cst_113 = arith.constant 1.000000e-01 : f32
    %248 = vector.broadcast %cst_113 : f32 to vector<2x128xf32>
    %249 = arith.mulf %248, %245 : vector<2x128xf32>
    %250 = arith.addf %247, %249 : vector<2x128xf32>
    %251 = arith.mulf %227, %5 : vector<2x128xf32>
    %252 = arith.subf %250, %251 : vector<2x128xf32>
    %253 = arith.subf %252, %240 : vector<2x128xf32>
    %cst_114 = arith.constant 0.000000e+00 : f32
    %254 = vector.broadcast %cst_114 : f32 to vector<2x128xf32>
    %255 = arith.cmpf ogt, %253, %254 : vector<2x128xf32>
    %cst_115 = arith.constant 0.000000e+00 : f32
    %256 = vector.broadcast %cst_115 : f32 to vector<2x128xf32>
    %257 = arith.cmpf ole, %234, %256 : vector<2x128xf32>
    %258 = arith.andi %255, %257 : vector<2x128xi1>
    %259 = arith.extui %258 : vector<2x128xi1> to vector<2x128xi32>
    %260 = arith.sitofp %259 : vector<2x128xi32> to vector<2x128xf32>
    %cst_116 = arith.constant 1.000000e+00 : f32
    %261 = vector.broadcast %cst_116 : f32 to vector<2x128xf32>
    %262 = arith.subf %234, %261 : vector<2x128xf32>
    %cst_117 = arith.constant 0.000000e+00 : f32
    %263 = vector.broadcast %cst_117 : f32 to vector<2x128xf32>
    %264 = arith.maximumf %262, %263 : vector<2x128xf32>
    %cst_118 = arith.constant 5.000000e+00 : f32
    %265 = vector.broadcast %cst_118 : f32 to vector<2x128xf32>
    %266 = arith.mulf %265, %260 : vector<2x128xf32>
    %267 = arith.addf %264, %266 : vector<2x128xf32>
    %cst_119 = arith.constant 0.949999988 : f32
    %268 = vector.broadcast %cst_119 : f32 to vector<2x128xf32>
    %269 = arith.mulf %268, %240 : vector<2x128xf32>
    %cst_120 = arith.constant 5.000000e-02 : f32
    %270 = vector.broadcast %cst_120 : f32 to vector<2x128xf32>
    %271 = arith.mulf %270, %260 : vector<2x128xf32>
    %272 = arith.mulf %271, %8 : vector<2x128xf32>
    %273 = arith.addf %269, %272 : vector<2x128xf32>
    %c0_121 = arith.constant 0 : index
    %c7_122 = arith.constant 7 : index
    %c0_123 = arith.constant 0 : index
    %274 = vector.load %arg7[%c0_121, %c7_122, %c0_123] : memref<2x8x128xf32, #tpu.memory_space<vmem>>, vector<2x1x128xf32>
    %275 = vector.shape_cast %274 : vector<2x1x128xf32> to vector<2x128xf32>
    %276 = vector.shape_cast %260 : vector<2x128xf32> to vector<2x1x128xf32>
    tpu.vector_store %arg7[%c0_121, %c7_122, %c0_123], %276 {strides = array<i32>} : memref<2x8x128xf32, #tpu.memory_space<vmem>>, vector<2x1x128xf32>,
    %c0_124 = arith.constant 0 : index
    %c0_125 = arith.constant 0 : index
    %277 = vector.load %arg8[%c0_124, %c0_125] : memref<2x128xf32, #tpu.memory_space<vmem>>, vector<2x128xf32>
    tpu.vector_store %arg8[%c0_124, %c0_125], %252 {strides = array<i32>} : memref<2x128xf32, #tpu.memory_space<vmem>>, vector<2x128xf32>,
    %c0_126 = arith.constant 0 : index
    %c0_127 = arith.constant 0 : index
    %278 = vector.load %arg9[%c0_126, %c0_127] : memref<2x128xf32, #tpu.memory_space<vmem>>, vector<2x128xf32>
    tpu.vector_store %arg9[%c0_126, %c0_127], %273 {strides = array<i32>} : memref<2x128xf32, #tpu.memory_space<vmem>>, vector<2x128xf32>,
    %c0_128 = arith.constant 0 : index
    %c0_129 = arith.constant 0 : index
    %279 = vector.load %arg10[%c0_128, %c0_129] : memref<2x128xf32, #tpu.memory_space<vmem>>, vector<2x128xf32>
    tpu.vector_store %arg10[%c0_128, %c0_129], %267 {strides = array<i32>} : memref<2x128xf32, #tpu.memory_space<vmem>>, vector<2x128xf32>,
    %c0_130 = arith.constant 0 : index
    %c0_131 = arith.constant 0 : index
    %280 = vector.load %arg11[%c0_130, %c0_131] : memref<2x128xf32, #tpu.memory_space<vmem>>, vector<2x128xf32>
    tpu.vector_store %arg11[%c0_130, %c0_131], %260 {strides = array<i32>} : memref<2x128xf32, #tpu.memory_space<vmem>>, vector<2x128xf32>,
    return
  }
  func.func @transform_0(%arg0: i32, %arg1: i32) -> (i32, i32, i32) {
    %c0_i32 = arith.constant 0 : i32
    %c0_i32_0 = arith.constant 0 : i32
    return %arg0, %arg1, %c0_i32 : i32, i32, i32
  }
  func.func @transform_1(%arg0: i32, %arg1: i32) -> (i32, i32) {
    %c0_i32 = arith.constant 0 : i32
    %c0_i32_0 = arith.constant 0 : i32
    %c0_i32_1 = arith.constant 0 : i32
    return %c0_i32, %c0_i32_0 : i32, i32
  }
  func.func @transform_2(%arg0: i32, %arg1: i32) -> (i32, i32) {
    %c0_i32 = arith.constant 0 : i32
    %c0_i32_0 = arith.constant 0 : i32
    %c0_i32_1 = arith.constant 0 : i32
    return %c0_i32, %c0_i32_0 : i32, i32
  }
  func.func @transform_3(%arg0: i32, %arg1: i32) -> (i32, i32) {
    %c0_i32 = arith.constant 0 : i32
    %c0_i32_0 = arith.constant 0 : i32
    %c0_i32_1 = arith.constant 0 : i32
    return %c0_i32, %c0_i32_0 : i32, i32
  }
  func.func @transform_4(%arg0: i32, %arg1: i32) -> (i32, i32) {
    %c0_i32 = arith.constant 0 : i32
    %c0_i32_0 = arith.constant 0 : i32
    %c0_i32_1 = arith.constant 0 : i32
    return %c0_i32, %c0_i32_0 : i32, i32
  }
  func.func @transform_5(%arg0: i32, %arg1: i32) -> (i32, i32, i32) {
    %c0_i32 = arith.constant 0 : i32
    %c0_i32_0 = arith.constant 0 : i32
    return %arg0, %arg1, %c0_i32 : i32, i32, i32
  }
}

</mosaic_0001>

<llo_original>
// kernel: tpu_custom_call.1
$region0: #{tpu_custom_call.1}
  #allocation0 [shape = 'u32[]', space=smem, size = 0x4, offset = 0x4, fixed_abs, tag = 'smem constant byte address 0x4 - core index']
  #allocation1 [shape = 'u32[72,128]{1,0:T(1,128)}', space=vmem, size = 0x9000, scoped, tag = 'internal scratch']
  #allocation2 [shape = 'f32[2,128]{1,0:T(2,128)}', space=vmem, size = 0x400, scoped, tag = 'scratch operand']
  #allocation3 [shape = 'f32[2,128]{1,0:T(2,128)}', space=vmem, size = 0x400, scoped, tag = 'scratch operand']
  #allocation4 [shape = 'f32[2,128]{1,0:T(2,128)}', space=vmem, size = 0x400, scoped, tag = 'scratch operand']
  #allocation5 [shape = 'f32[2,128]{1,0:T(2,128)}', space=vmem, size = 0x400, scoped, tag = 'scratch operand']
  %s0 = inlined_call_operand.hbm [shape: f32[2,8,128], index: 0, kind: input, shape index: {}]
  %s1 = inlined_call_operand.hbm [shape: f32[1,128], index: 1, kind: input, shape index: {}]
  %s2 = inlined_call_operand.vmem [shape: f32[1,128], index: 2, kind: input, shape index: {}]
  %s3 = inlined_call_operand.vmem [shape: f32[1,128], index: 3, kind: input, shape index: {}]
  %s4 = inlined_call_operand.vmem [shape: f32[1,128], index: 4, kind: input, shape index: {}]
  %s5 = inlined_call_operand.hbm [shape: f32[2,8,128], index: 5, kind: output, shape index: {}]
  %s6 = sld [smem:[#allocation0]]
  $region42: #{tpu_custom_call.1} parent=0
    _
  %s8 = ssub.s32 1, %s6
  %s9 = scalar_select 0, %s8, %s6
  $region1: #{tpu_custom_call.1} parent=0
    #allocation6 [shape = 'u8[8192]{0}', space=vmem, size = 0x2000, scoped, tag = 'input window, operand 0, single buffered']
    #allocation7 [shape = 's32[1]{0}', space=sflag, size = 0x4, scoped, tag = 'scoped memory for tpu_custom_call.1']
    #allocation8 [shape = 's32[1]{0}', space=sflag, size = 0x4, scoped, tag = 'scoped memory for tpu_custom_call.1']
    #allocation9 [shape = 'u8[512]{0}', space=vmem, size = 0x400, scoped, tag = 'input window, operand 1, single buffered']
    #allocation10 [shape = 's32[1]{0}', space=sflag, size = 0x4, scoped, tag = 'scoped memory for tpu_custom_call.1']
    #allocation11 [shape = 'u8[8192]{0}', space=vmem, size = 0x2000, scoped, tag = 'output window, operand 0, single buffered']
    %10 = vsyncpa [#allocation7], 0
    %11 = vsyncpa [#allocation10], 0
    %12 = vsyncpa [#allocation8], 0
    // Predicated region
    $region2: #{tpu_custom_call.1} parent=1 // pred_check
      _
    $region3: #{tpu_custom_call.1} parent=1 // pred_check_branch
      %14 = sbr.rel (0) target = $region5
    $region4: #{tpu_custom_call.1} parent=1 // pred_region
      %16 = vsyncadd [#allocation7], 0
      %s17 = sshll.u32 %s0, 4
      %s18 = int_to_ptr.hbm [resolvable:$true] %s17
      %s19 = sshll.u32 [#allocation6], 4
      %s20 = int_to_ptr.vmem [resolvable:$true] %s19
      %25 = dma.hbm_to_vmem [thread:$0]  %s18, 256, %s20, [#allocation7], 128, 128, 8
    $region5: #{tpu_custom_call.1} parent=1 // pred_fallthru
      _
    // Predicated region
    $region6: #{tpu_custom_call.1} parent=1 // pred_check
      _
    $region7: #{tpu_custom_call.1} parent=1 // pred_check_branch
      %27 = sbr.rel (0) target = $region9
    $region8: #{tpu_custom_call.1} parent=1 // pred_region
      %29 = vsyncadd [#allocation10], 0
      %s31 = sshll.u32 %s1, 4
      %s32 = int_to_ptr.hbm [resolvable:$true] %s31
      %s33 = sshll.u32 [#allocation9], 4
      %s34 = int_to_ptr.vmem [resolvable:$true] %s33
      %36 = dma.hbm_to_vmem [thread:$0]  %s32, 16, %s34, [#allocation10]
    $region9: #{tpu_custom_call.1} parent=1 // pred_fallthru
      _
    // Predicated region
    $region10: #{tpu_custom_call.1} parent=1 // pred_check
      _
    $region11: #{tpu_custom_call.1} parent=1 // pred_check_branch
      %38 = sbr.rel (0) target = $region13
    $region12: #{tpu_custom_call.1} parent=1 // pred_region
      _
    $region13: #{tpu_custom_call.1} parent=1 // pred_fallthru
      _
    // Predicated region
    $region14: #{tpu_custom_call.1} parent=1 // pred_check
      _
    $region15: #{tpu_custom_call.1} parent=1 // pred_check_branch
      %40 = sbr.rel (0) target = $region17
    $region16: #{tpu_custom_call.1} parent=1 // pred_region
      _
    $region17: #{tpu_custom_call.1} parent=1 // pred_fallthru
      _
    // Predicated region
    $region18: #{tpu_custom_call.1} parent=1 // pred_check
      _
    $region19: #{tpu_custom_call.1} parent=1 // pred_check_branch
      %42 = sbr.rel (0) target = $region21
    $region20: #{tpu_custom_call.1} parent=1 // pred_region
      _
    $region21: #{tpu_custom_call.1} parent=1 // pred_fallthru
      _
    // Predicated region
    $region22: #{tpu_custom_call.1} parent=1 // pred_check
      _
    $region23: #{tpu_custom_call.1} parent=1 // pred_check_branch
      %44 = sbr.rel (0) target = $region25
    $region24: #{tpu_custom_call.1} parent=1 // pred_region
      %46 = dma.done [#allocation7], 256
    $region25: #{tpu_custom_call.1} parent=1 // pred_fallthru
      _
    // Predicated region
    $region26: #{tpu_custom_call.1} parent=1 // pred_check
      _
    $region27: #{tpu_custom_call.1} parent=1 // pred_check_branch
      %48 = sbr.rel (0) target = $region29
    $region28: #{tpu_custom_call.1} parent=1 // pred_region
      %50 = dma.done [#allocation10], 16
    $region29: #{tpu_custom_call.1} parent=1 // pred_fallthru
      _
    %p51 = scmp.eq.s32.totalorder 0, 0
    // Predicated region
    $region30: #{tpu_custom_call.1} parent=1 // pred_check
      %p52 = pneg %p51
    $region31: #{tpu_custom_call.1} parent=1 // pred_check_branch
      %54 = sbr.rel (%p52) target = $region33
    $region32: #{tpu_custom_call.1} parent=1 // pred_region
      %v55 = vld [vmem:[%s3] sm:$0x1]
      %v57 = vperm.slane %v55, 0
      %59 = vst [vmem:[#allocation2] sm:$0x3] %v57
      %v60 = vld [vmem:[%s4] sm:$0x1]
      %v62 = vperm.slane %v60, 0
      %64 = vst [vmem:[#allocation3] sm:$0x3] %v62
      %65 = vst [vmem:[#allocation4] sm:$0x3] 0.0
      %66 = vst [vmem:[#allocation5] sm:$0x3] 0.0
    $region33: #{tpu_custom_call.1} parent=1 // pred_fallthru
      _
    %v67 = vld [vmem:[#allocation9] sm:$0x1]
    %v69 = vperm.slane %v67, 0
    %v71 = vld [vmem:[%s2] sm:$0x1]
    %v73 = vperm.slane %v71, 0
    %v75 = vld [vmem:[#allocation2] sm:$0x3]
    %v76 = vld [vmem:[#allocation3] sm:$0x3]
    %v77 = vld [vmem:[#allocation4] sm:$0x3]
    %v78 = vld [vmem:[#allocation5] sm:$0x3]
    %v79 = vld [vmem:[#allocation6] sm:$0x1]
    %v80 = vld [vmem:[#allocation6 + $0x8] sm:$0x1]
    %v81 = vmul.f32 %v75, 0.9
    %v82 = vmul.f32 %v79, 0.1
    %v83 = vmul.f32 %v80, 0.1
    %v86 = vrot.slane %v83, 7
    %vm87 = vcmask 1041409
    %v88 = vsel %vm87, %v86, %v82
    %v90 = vadd.f32 %v81, %v88
    %v91 = vmul.f32 %v78, %v69
    %v92 = vsub.f32 %v90, %v91
    %v93 = vsub.f32 %v92, %v76
    %vm94 = vcmp.gt.f32.partialorder %v93, 0.0
    %vm95 = vcmp.le.f32.partialorder %v77, 0.0
    %vm96 = vmand %vm94, %vm95
    %v97 = vsel %vm96, 1, 0
    %v98 = vcvt.s32.f32 %v97
    %v99 = vsub.f32 %v77, 1.0
    %v100 = vmax.f32 %v99, 0.0
    %v101 = vmul.f32 %v98, 5.0
    %v102 = vadd.f32 %v100, %v101
    %v103 = vmul.f32 %v76, 0.95
    %v104 = vmul.f32 %v98, 0.05
    %v105 = vmul.f32 %v104, %v73
    %v106 = vadd.f32 %v103, %v105
    %v108 = vrot.slane %v98, 1
    %110 = vst [vmem:[#allocation11] sm:$0x1] %v98
    %111 = vst [vmem:[#allocation11 + $0x8] sm:$0x1] %v108
    %v112 = vld [vmem:[#allocation6 + $0x1] sm:$0x1]
    %v113 = vld [vmem:[#allocation6 + $0x9] sm:$0x1]
    %v114 = vmul.f32 %v92, 0.9
    %v115 = vmul.f32 %v112, 0.1
    %v116 = vmul.f32 %v113, 0.1
    %v119 = vrot.slane %v116, 7
    %v120 = vsel %vm87, %v119, %v115
    %v122 = vadd.f32 %v114, %v120
    %v123 = vmul.f32 %v98, %v69
    %v124 = vsub.f32 %v122, %v123
    %v125 = vsub.f32 %v124, %v106
    %vm126 = vcmp.gt.f32.partialorder %v125, 0.0
    %vm127 = vcmp.le.f32.partialorder %v102, 0.0
    %vm128 = vmand %vm126, %vm127
    %v129 = vsel %vm128, 1, 0
    %v130 = vcvt.s32.f32 %v129
    %v131 = vsub.f32 %v102, 1.0
    %v132 = vmax.f32 %v131, 0.0
    %v133 = vmul.f32 %v130, 5.0
    %v134 = vadd.f32 %v132, %v133
    %v135 = vmul.f32 %v106, 0.95
    %v136 = vmul.f32 %v130, 0.05
    %v137 = vmul.f32 %v136, %v73
    %v138 = vadd.f32 %v135, %v137
    %v140 = vrot.slane %v130, 1
    %142 = vst [vmem:[#allocation11 + $0x1] sm:$0x1] %v130
    %143 = vst [vmem:[#allocation11 + $0x9] sm:$0x1] %v140
    %v144 = vld [vmem:[#allocation6 + $0x2] sm:$0x1]
    %v145 = vld [vmem:[#allocation6 + $0xa] sm:$0x1]
    %v146 = vmul.f32 %v124, 0.9
    %v147 = vmul.f32 %v144, 0.1
    %v148 = vmul.f32 %v145, 0.1
    %v151 = vrot.slane %v148, 7
    %v152 = vsel %vm87, %v151, %v147
    %v154 = vadd.f32 %v146, %v152
    %v155 = vmul.f32 %v130, %v69
    %v156 = vsub.f32 %v154, %v155
    %v157 = vsub.f32 %v156, %v138
    %vm158 = vcmp.gt.f32.partialorder %v157, 0.0
    %vm159 = vcmp.le.f32.partialorder %v134, 0.0
    %vm160 = vmand %vm158, %vm159
    %v161 = vsel %vm160, 1, 0
    %v162 = vcvt.s32.f32 %v161
    %v163 = vsub.f32 %v134, 1.0
    %v164 = vmax.f32 %v163, 0.0
    %v165 = vmul.f32 %v162, 5.0
    %v166 = vadd.f32 %v164, %v165
    %v167 = vmul.f32 %v138, 0.95
    %v168 = vmul.f32 %v162, 0.05
    %v169 = vmul.f32 %v168, %v73
    %v170 = vadd.f32 %v167, %v169
    %v172 = vrot.slane %v162, 1
    %174 = vst [vmem:[#allocation11 + $0x2] sm:$0x1] %v162
    %175 = vst [vmem:[#allocation11 + $0xa] sm:$0x1] %v172
    %v176 = vld [vmem:[#allocation6 + $0x3] sm:$0x1]
    %v177 = vld [vmem:[#allocation6 + $0xb] sm:$0x1]
    %v178 = vmul.f32 %v156, 0.9
    %v179 = vmul.f32 %v176, 0.1
    %v180 = vmul.f32 %v177, 0.1
    %v183 = vrot.slane %v180, 7
    %v184 = vsel %vm87, %v183, %v179
    %v186 = vadd.f32 %v178, %v184
    %v187 = vmul.f32 %v162, %v69
    %v188 = vsub.f32 %v186, %v187
    %v189 = vsub.f32 %v188, %v170
    %vm190 = vcmp.gt.f32.partialorder %v189, 0.0
    %vm191 = vcmp.le.f32.partialorder %v166, 0.0
    %vm192 = vmand %vm190, %vm191
    %v193 = vsel %vm192, 1, 0
    %v194 = vcvt.s32.f32 %v193
    %v195 = vsub.f32 %v166, 1.0
    %v196 = vmax.f32 %v195, 0.0
    %v197 = vmul.f32 %v194, 5.0
    %v198 = vadd.f32 %v196, %v197
    %v199 = vmul.f32 %v170, 0.95
    %v200 = vmul.f32 %v194, 0.05
    %v201 = vmul.f32 %v200, %v73
    %v202 = vadd.f32 %v199, %v201
    %v204 = vrot.slane %v194, 1
    %206 = vst [vmem:[#allocation11 + $0x3] sm:$0x1] %v194
    %207 = vst [vmem:[#allocation11 + $0xb] sm:$0x1] %v204
    %v208 = vld [vmem:[#allocation6 + $0x4] sm:$0x1]
    %v209 = vld [vmem:[#allocation6 + $0xc] sm:$0x1]
    %v210 = vmul.f32 %v188, 0.9
    %v211 = vmul.f32 %v208, 0.1
    %v212 = vmul.f32 %v209, 0.1
    %v215 = vrot.slane %v212, 7
    %v216 = vsel %vm87, %v215, %v211
    %v218 = vadd.f32 %v210, %v216
    %v219 = vmul.f32 %v194, %v69
    %v220 = vsub.f32 %v218, %v219
    %v221 = vsub.f32 %v220, %v202
    %vm222 = vcmp.gt.f32.partialorder %v221, 0.0
    %vm223 = vcmp.le.f32.partialorder %v198, 0.0
    %vm224 = vmand %vm222, %vm223
    %v225 = vsel %vm224, 1, 0
    %v226 = vcvt.s32.f32 %v225
    %v227 = vsub.f32 %v198, 1.0
    %v228 = vmax.f32 %v227, 0.0
    %v229 = vmul.f32 %v226, 5.0
    %v230 = vadd.f32 %v228, %v229
    %v231 = vmul.f32 %v202, 0.95
    %v232 = vmul.f32 %v226, 0.05
    %v233 = vmul.f32 %v232, %v73
    %v234 = vadd.f32 %v231, %v233
    %v236 = vrot.slane %v226, 1
    %238 = vst [vmem:[#allocation11 + $0x4] sm:$0x1] %v226
    %239 = vst [vmem:[#allocation11 + $0xc] sm:$0x1] %v236
    %v240 = vld [vmem:[#allocation6 + $0x5] sm:$0x1]
    %v241 = vld [vmem:[#allocation6 + $0xd] sm:$0x1]
    %v242 = vmul.f32 %v220, 0.9
    %v243 = vmul.f32 %v240, 0.1
    %v244 = vmul.f32 %v241, 0.1
    %v247 = vrot.slane %v244, 7
    %v248 = vsel %vm87, %v247, %v243
    %v250 = vadd.f32 %v242, %v248
    %v251 = vmul.f32 %v226, %v69
    %v252 = vsub.f32 %v250, %v251
    %v253 = vsub.f32 %v252, %v234
    %vm254 = vcmp.gt.f32.partialorder %v253, 0.0
    %vm255 = vcmp.le.f32.partialorder %v230, 0.0
    %vm256 = vmand %vm254, %vm255
    %v257 = vsel %vm256, 1, 0
    %v258 = vcvt.s32.f32 %v257
    %v259 = vsub.f32 %v230, 1.0
    %v260 = vmax.f32 %v259, 0.0
    %v261 = vmul.f32 %v258, 5.0
    %v262 = vadd.f32 %v260, %v261
    %v263 = vmul.f32 %v234, 0.95
    %v264 = vmul.f32 %v258, 0.05
    %v265 = vmul.f32 %v264, %v73
    %v266 = vadd.f32 %v263, %v265
    %v268 = vrot.slane %v258, 1
    %270 = vst [vmem:[#allocation11 + $0x5] sm:$0x1] %v258
    %271 = vst [vmem:[#allocation11 + $0xd] sm:$0x1] %v268
    %v272 = vld [vmem:[#allocation6 + $0x6] sm:$0x1]
    %v273 = vld [vmem:[#allocation6 + $0xe] sm:$0x1]
    %v274 = vmul.f32 %v252, 0.9
    %v275 = vmul.f32 %v272, 0.1
    %v276 = vmul.f32 %v273, 0.1
    %v279 = vrot.slane %v276, 7
    %v280 = vsel %vm87, %v279, %v275
    %v282 = vadd.f32 %v274, %v280
    %v283 = vmul.f32 %v258, %v69
    %v284 = vsub.f32 %v282, %v283
    %v285 = vsub.f32 %v284, %v266
    %vm286 = vcmp.gt.f32.partialorder %v285, 0.0
    %vm287 = vcmp.le.f32.partialorder %v262, 0.0
    %vm288 = vmand %vm286, %vm287
    %v289 = vsel %vm288, 1, 0
    %v290 = vcvt.s32.f32 %v289
    %v291 = vsub.f32 %v262, 1.0
    %v292 = vmax.f32 %v291, 0.0
    %v293 = vmul.f32 %v290, 5.0
    %v294 = vadd.f32 %v292, %v293
    %v295 = vmul.f32 %v266, 0.95
    %v296 = vmul.f32 %v290, 0.05
    %v297 = vmul.f32 %v296, %v73
    %v298 = vadd.f32 %v295, %v297
    %v300 = vrot.slane %v290, 1
    %302 = vst [vmem:[#allocation11 + $0x6] sm:$0x1] %v290
    %303 = vst [vmem:[#allocation11 + $0xe] sm:$0x1] %v300
    %v304 = vld [vmem:[#allocation6 + $0x7] sm:$0x1]
    %v305 = vld [vmem:[#allocation6 + $0xf] sm:$0x1]
    %v306 = vmul.f32 %v284, 0.9
    %v307 = vmul.f32 %v304, 0.1
    %v308 = vmul.f32 %v305, 0.1
    %v311 = vrot.slane %v308, 7
    %v312 = vsel %vm87, %v311, %v307
    %v314 = vadd.f32 %v306, %v312
    %v315 = vmul.f32 %v290, %v69
    %v316 = vsub.f32 %v314, %v315
    %v317 = vsub.f32 %v316, %v298
    %vm318 = vcmp.gt.f32.partialorder %v317, 0.0
    %vm319 = vcmp.le.f32.partialorder %v294, 0.0
    %vm320 = vmand %vm318, %vm319
    %v321 = vsel %vm320, 1, 0
    %v322 = vcvt.s32.f32 %v321
    %v323 = vsub.f32 %v294, 1.0
    %v324 = vmax.f32 %v323, 0.0
    %v325 = vmul.f32 %v322, 5.0
    %v326 = vadd.f32 %v324, %v325
    %v327 = vmul.f32 %v298, 0.95
    %v328 = vmul.f32 %v322, 0.05
    %v329 = vmul.f32 %v328, %v73
    %v330 = vadd.f32 %v327, %v329
    %v332 = vrot.slane %v322, 1
    %334 = vst [vmem:[#allocation11 + $0x7] sm:$0x1] %v322
    %335 = vst [vmem:[#allocation11 + $0xf] sm:$0x1] %v332
    %336 = vst [vmem:[#allocation2] sm:$0x3] %v316
    %337 = vst [vmem:[#allocation3] sm:$0x3] %v330
    %338 = vst [vmem:[#allocation4] sm:$0x3] %v326
    %339 = vst [vmem:[#allocation5] sm:$0x3] %v322
    // Predicated region
    $region34: #{tpu_custom_call.1} parent=1 // pred_check
      _
    $region35: #{tpu_custom_call.1} parent=1 // pred_check_branch
      %341 = sbr.rel (0) target = $region37
    $region36: #{tpu_custom_call.1} parent=1 // pred_region
      %343 = vsyncadd [#allocation8], 0
      %s344 = sshll.u32 [#allocation11], 4
      %s345 = int_to_ptr.vmem [resolvable:$true] %s344
      %s346 = sshll.u32 %s5, 4
      %s347 = int_to_ptr.hbm [resolvable:$true] %s346
      %352 = dma.vmem_to_hbm [thread:$0]  %s345, 256, %s347, [#allocation8], 128, 128, 8
    $region37: #{tpu_custom_call.1} parent=1 // pred_fallthru
      _
    // Predicated region
    $region38: #{tpu_custom_call.1} parent=1 // pred_check
      _
    $region39: #{tpu_custom_call.1} parent=1 // pred_check_branch
      %354 = sbr.rel (0) target = $region41
    $region40: #{tpu_custom_call.1} parent=1 // pred_region
      %356 = dma.done [#allocation8], 256
    $region41: #{tpu_custom_call.1} parent=1 // pred_fallthru
      _
    %357 = vsyncpa [#allocation7], 1
    %358 = vsyncpa [#allocation10], 1
    %359 = vsyncpa [#allocation8], 1

</llo_original>
